<compile_context>
chip_gen: v5e
topology: v5e:2x2
jax: 0.10.0
libtpu: 0.0.40
codegen_flags: <defaults>
</compile_context>

<pallas_src>
import math
import functools

import jax
import jax.numpy as jnp
from jax import lax
from jax.experimental import pallas as pl
from jax.experimental.pallas import tpu as pltpu


def _round_up(x, m):
    return ((x + m - 1) // m) * m


def _pick_row_tile(n, d, in_itemsize, block_n, vmem_limit_bytes):
    """Pick the N-axis row tile from the VMEM budget (lane padding included)."""
    d_pad = _round_up(d, 128)  # (tn, D) VMEM tiles lane-pad D up to 128
    # Per-row VMEM estimate: double-buffered native-dtype input, in-kernel f32
    # working set (x, x*x), double-buffered (8-sublane-padded) (K, tn) output.
    bytes_per_row = 2 * d_pad * in_itemsize + 2 * d_pad * 4 + 2 * 8 * 4
    tn = int(vmem_limit_bytes * 0.6) // bytes_per_row
    tn = max(128, min(32768, (tn // 128) * 128))
    if block_n is not None:                       # caller-provided cap
        tn = max(128, min(tn, (block_n // 128) * 128))
    if tn >= n:
        if n >= 1024:
            # Keep >= 2 "parallel" grid steps so both v7x TensorCores get a
            # row tile (one extra ~0.35 us step is noise on 1-TC v5e/v6e).
            tn = _round_up(-(-n // 2), 128)
        else:
            # Single block covering the whole small input: block dims equal the
            # array dims, so no (8,128) alignment or row padding is needed.
            tn = n
    return tn


def _clustering_kernel(x_ref, negc2_ref, csq_ref, o_ref, *, inv_alpha, power):
    # x_ref:     (TN, D)  input rows for this tile (streamed, native dtype)
    # negc2_ref: (K, D)   -2 * clusters  (f32, resident across tiles)
    # csq_ref:   (K, 1)   ||c_k||^2     (f32, resident across tiles)
    # o_ref:     (K, TN)  transposed soft assignments (lane-dense store)
    x = x_ref[...].astype(jnp.float32)   # cast in VMEM; avoids a wrapper pass
    negc2 = negc2_ref[...]
    csq = csq_ref[...]

    # Cross term on the MXU, produced directly in the (K, TN) orientation:
    #   cross[k, n] = -2 * <c_k, x_n>
    cross = lax.dot_general(
        negc2, x, (((1,), (1,)), ((), ())),
        preferred_element_type=jnp.float32)

    # ||x_n||^2 as a lane-dense (1, TN) row, also via the MXU (avoids a
    # sublane->lane relayout of a column reduction).
    ones_row = jnp.ones((1, x.shape[1]), jnp.float32)
    xsq = lax.dot_general(
        ones_row, x * x, (((1,), (1,)), ((), ())),
        preferred_element_type=jnp.float32)

    # NOTE: expansion form ||x||^2 - 2<x,c> + ||c||^2 can cancel when a point
    # sits very close to a centroid; clamp at 0 and accept ~1e-6 relative error
    # versus the (x - c) reference form.
    dist = jnp.maximum(csq + xsq + cross, 0.0)     # (K, TN) squared distances

    def _recip(v):
        r = pl.reciprocal(v, approx=True)          # EUP vrcp (free slot)
        return r * (2.0 - v * r)                   # one Newton step -> ~f32

    if power == 1.0:
        # alpha == 1: (1 + d)^(-1) is already the unnormalized q — skip the pow.
        q = _recip(1.0 + dist * inv_alpha)
    else:
        # (1 + d/alpha)^(-p) == exp(-p * log(1 + d/alpha)); single EUP chain.
        q = jnp.exp(-power * jnp.log(1.0 + dist * inv_alpha))

    # Normalize over clusters (axis 0 here == original cluster axis).
    denom = jnp.sum(q, axis=0, keepdims=True)      # (1, TN)
    o_ref[...] = (q * _recip(denom)).astype(o_ref.dtype)


def clustering_layer(inputs, clusters, alpha=1.0, *, block_n=None,
                     vmem_limit_bytes=48 * 1024 * 1024,
                     out_dtype=jnp.float32, transposed_output=False):
    """inputs: (N, D), clusters: (K, D) -> soft assignments.

    Returns (N, K) by default (module semantics); pass transposed_output=True
    to get the kernel-native (K, N) layout and skip the wrapper transpose.
    vmem_limit_bytes default (48 MiB) is safe on v7x; raise to ~96 MiB on
    v5e/v6e for even larger row tiles.
    """
    n, d = inputs.shape
    k, d2 = clusters.shape
    assert d == d2, "latent dims of inputs and clusters must match"

    # Hoist cluster-side constants out of the per-tile loop (K x D is tiny).
    c32 = clusters.astype(jnp.float32)
    negc2 = -2.0 * c32
    csq = jnp.sum(c32 * c32, axis=1, keepdims=True)          # (K, 1)

    in_itemsize = jnp.dtype(inputs.dtype).itemsize
    out_itemsize = jnp.dtype(out_dtype).itemsize
    tn = _pick_row_tile(n, d, in_itemsize, block_n, vmem_limit_bytes)
    grid_n = pl.cdiv(n, tn)

    power = (float(alpha) + 1.0) / 2.0
    kernel = functools.partial(
        _clustering_kernel, inv_alpha=1.0 / float(alpha), power=power)

    cost = pl.CostEstimate(
        flops=2 * n * k * d + 2 * n * d + 8 * n * k,
        transcendentals=(n * k if power == 1.0 else 3 * n * k),
        bytes_accessed=n * d * in_itemsize + n * k * out_itemsize
                       + k * (d + 1) * 4)

    q_t = pl.pallas_call(
        kernel,
        out_shape=jax.ShapeDtypeStruct((k, n), out_dtype),
        grid_spec=pltpu.PrefetchScalarGridSpec(
            num_scalar_prefetch=0,
            grid=(grid_n,),
            in_specs=[
                pl.BlockSpec((tn, d), lambda i: (i, 0)),   # streamed input rows
                pl.BlockSpec((k, d), lambda i: (0, 0)),    # resident -2*clusters
                pl.BlockSpec((k, 1), lambda i: (0, 0)),    # resident ||c||^2
            ],
            out_specs=pl.BlockSpec((k, tn), lambda i: (0, i)),
        ),
        compiler_params=pltpu.CompilerParams(
            dimension_semantics=("parallel",),
            vmem_limit_bytes=vmem_limit_bytes),
        cost_estimate=cost,
    )(inputs, negc2, csq)

    if transposed_output:
        return q_t            # (K, N): preferred layout for downstream DEC math
    # Module semantics require (N, K); output bytes are only ~K/D of the input
    # read, so this one extra small XLA transpose pass is cheap relative to the
    # kernel's lane-dense (K, N) store.
    return q_t.T


def init_clusters(key, n_clusters, latent_dim):
    # torch kaiming_uniform_(a=sqrt(5)) on (n_clusters, latent_dim):
    # fan_in = latent_dim, gain = sqrt(2/(1+5)), bound = gain*sqrt(3/fan_in)
    gain = math.sqrt(2.0 / (1.0 + 5.0))
    bound = gain * math.sqrt(3.0 / latent_dim)
    return jax.random.uniform(
        key, (n_clusters, latent_dim), jnp.float32, minval=-bound, maxval=bound)


def _reference(inputs, clusters, alpha):
    # Same math as the PyTorch forward, in plain JAX.
    diff = inputs[:, None, :].astype(jnp.float32) - clusters[None, :, :]
    q = 1.0 / (1.0 + jnp.sum(diff * diff, axis=2) / alpha)
    q = q ** ((alpha + 1.0) / 2.0)
    return q / jnp.sum(q, axis=1, keepdims=True)


if __name__ == "__main__":
    key = jax.random.PRNGKey(0)
    k_in, k_cl, k_in2, k_cl2 = jax.random.split(key, 4)

    # --- case 1: module-default small shapes, alpha = 1 (pow skipped at trace),
    #             single full-array block (no padding, no partial tiles).
    n_clusters, latent_dim, batch, alpha = 4, 32, 8, 1.0
    inputs = jax.random.normal(k_in, (batch, latent_dim), jnp.float32)
    clusters = init_clusters(k_cl, n_clusters, latent_dim)

    q = jax.block_until_ready(clustering_layer(inputs, clusters, alpha=alpha))
    q_ref = _reference(inputs, clusters, alpha)
    assert q.shape == (batch, n_clusters)
    assert jnp.allclose(q, q_ref, atol=1e-5, rtol=1e-5)
    assert jnp.allclose(jnp.sum(q, axis=1), 1.0, atol=1e-5)

    # --- case 2: multi-tile grid with a ragged (masked) tail tile, alpha != 1.
    n2, k2, d2, alpha2 = 260, 6, 48, 2.0
    inputs2 = jax.random.normal(k_in2, (n2, d2), jnp.float32)
    clusters2 = init_clusters(k_cl2, k2, d2)
    q2 = jax.block_until_ready(
        clustering_layer(inputs2, clusters2, alpha=alpha2, block_n=128))
    q2_ref = _reference(inputs2, clusters2, alpha2)
    assert q2.shape == (n2, k2)
    assert jnp.allclose(q2, q2_ref, atol=1e-5, rtol=1e-5)
    assert jnp.allclose(jnp.sum(q2, axis=1), 1.0, atol=1e-5)

    # --- case 3: kernel-native transposed output (no wrapper transpose pass).
    q3 = jax.block_until_ready(
        clustering_layer(inputs, clusters, alpha=alpha, transposed_output=True))
    assert q3.shape == (n_clusters, batch)
    assert jnp.allclose(q3.T, q_ref, atol=1e-5, rtol=1e-5)

    print("KERNEL_OK")
</pallas_src>

<mosaic_0001>
module attributes {stable_mosaic.version = 11 : i64} {
  func.func @_clustering_kernel(%arg0: i32, %arg1: memref<8x32xf32, #tpu.memory_space<vmem>>, %arg2: memref<4x32xf32, #tpu.memory_space<vmem>>, %arg3: memref<4x1xf32, #tpu.memory_space<vmem>>, %arg4: memref<4x8xf32, #tpu.memory_space<vmem>>) attributes {dimension_semantics = [#tpu.dimension_semantics<parallel>], iteration_bounds = array<i64: 1>, scalar_prefetch = 0 : i64, scratch_operands = 0 : i64, tpu.core_type = #tpu.core_type<tc>, window_params = [{transform_indices = @transform_0, window_bounds = array<i64: 8, 32>}, {pipeline_mode = #tpu.pipeline_mode<synchronous>, transform_indices = @transform_1, window_bounds = array<i64: 4, 32>}, {pipeline_mode = #tpu.pipeline_mode<synchronous>, transform_indices = @transform_2, window_bounds = array<i64: 4, 1>}, {transform_indices = @transform_3, window_bounds = array<i64: 4, 8>}]} {
    %c0 = arith.constant 0 : index
    %c0_0 = arith.constant 0 : index
    %0 = vector.load %arg1[%c0, %c0_0] : memref<8x32xf32, #tpu.memory_space<vmem>>, vector<8x32xf32>
    %c0_1 = arith.constant 0 : index
    %c0_2 = arith.constant 0 : index
    %1 = vector.load %arg2[%c0_1, %c0_2] : memref<4x32xf32, #tpu.memory_space<vmem>>, vector<4x32xf32>
    %c0_3 = arith.constant 0 : index
    %c0_4 = arith.constant 0 : index
    %2 = vector.load %arg3[%c0_3, %c0_4] : memref<4x1xf32, #tpu.memory_space<vmem>>, vector<4x1xf32>
    %cst = arith.constant dense<0.000000e+00> : vector<4x8xf32>
    %3 = tpu.matmul %1, %0, %cst {dimension_numbers = #tpu.dot_dimension_numbers<[1], [1], [0], [0], [0, 0, 1, 0], [], []>} : vector<4x32xf32>, vector<8x32xf32>, vector<4x8xf32> -> vector<4x8xf32>
    %cst_5 = arith.constant 1.000000e+00 : f32
    %4 = vector.broadcast %cst_5 : f32 to vector<1x32xf32>
    %5 = arith.mulf %0, %0 : vector<8x32xf32>
    %cst_6 = arith.constant dense<0.000000e+00> : vector<1x8xf32>
    %6 = tpu.matmul %4, %5, %cst_6 {dimension_numbers = #tpu.dot_dimension_numbers<[1], [1], [0], [0], [0, 0, 1, 0], [], []>} : vector<1x32xf32>, vector<8x32xf32>, vector<1x8xf32> -> vector<1x8xf32>
    %7 = vector.broadcast %2 : vector<4x1xf32> to vector<4x8xf32>
    %8 = vector.broadcast %6 : vector<1x8xf32> to vector<4x8xf32>
    %9 = arith.addf %7, %8 : vector<4x8xf32>
    %10 = arith.addf %9, %3 : vector<4x8xf32>
    %cst_7 = arith.constant 0.000000e+00 : f32
    %11 = vector.broadcast %cst_7 : f32 to vector<4x8xf32>
    %12 = arith.maximumf %10, %11 : vector<4x8xf32>
    %cst_8 = arith.constant 1.000000e+00 : f32
    %13 = vector.broadcast %cst_8 : f32 to vector<4x8xf32>
    %14 = arith.mulf %12, %13 : vector<4x8xf32>
    %cst_9 = arith.constant 1.000000e+00 : f32
    %15 = vector.broadcast %cst_9 : f32 to vector<4x8xf32>
    %16 = arith.addf %15, %14 : vector<4x8xf32>
    %17 = tpu.reciprocal %16 {approx = true} : vector<4x8xf32> -> vector<4x8xf32>
    %18 = arith.mulf %16, %17 : vector<4x8xf32>
    %cst_10 = arith.constant 2.000000e+00 : f32
    %19 = vector.broadcast %cst_10 : f32 to vector<4x8xf32>
    %20 = arith.subf %19, %18 : vector<4x8xf32>
    %21 = arith.mulf %17, %20 : vector<4x8xf32>
    %cst_11 = arith.constant dense<0.000000e+00> : vector<8xf32>
    %22 = vector.multi_reduction <add>, %21, %cst_11 [0] : vector<4x8xf32> to vector<8xf32>
    %23 = vector.shape_cast %22 : vector<8xf32> to vector<1x8xf32>
    %24 = tpu.reciprocal %23 {approx = true} : vector<1x8xf32> -> vector<1x8xf32>
    %25 = arith.mulf %23, %24 : vector<1x8xf32>
    %cst_12 = arith.constant 2.000000e+00 : f32
    %26 = vector.broadcast %cst_12 : f32 to vector<1x8xf32>
    %27 = arith.subf %26, %25 : vector<1x8xf32>
    %28 = arith.mulf %24, %27 : vector<1x8xf32>
    %29 = vector.broadcast %28 : vector<1x8xf32> to vector<4x8xf32>
    %30 = arith.mulf %21, %29 : vector<4x8xf32>
    %c0_13 = arith.constant 0 : index
    %c0_14 = arith.constant 0 : index
    %31 = vector.load %arg4[%c0_13, %c0_14] : memref<4x8xf32, #tpu.memory_space<vmem>>, vector<4x8xf32>
    tpu.vector_store %arg4[%c0_13, %c0_14], %30 {strides = array<i32>} : memref<4x8xf32, #tpu.memory_space<vmem>>, vector<4x8xf32>,
    return
  }
  func.func @transform_0(%arg0: i32) -> (i32, i32) {
    %c0_i32 = arith.constant 0 : i32
    %c0_i32_0 = arith.constant 0 : i32
    return %arg0, %c0_i32 : i32, i32
  }
  func.func @transform_1(%arg0: i32) -> (i32, i32) {
    %c0_i32 = arith.constant 0 : i32
    %c0_i32_0 = arith.constant 0 : i32
    %c0_i32_1 = arith.constant 0 : i32
    return %c0_i32, %c0_i32_0 : i32, i32
  }
  func.func @transform_2(%arg0: i32) -> (i32, i32) {
    %c0_i32 = arith.constant 0 : i32
    %c0_i32_0 = arith.constant 0 : i32
    %c0_i32_1 = arith.constant 0 : i32
    return %c0_i32, %c0_i32_0 : i32, i32
  }
  func.func @transform_3(%arg0: i32) -> (i32, i32) {
    %c0_i32 = arith.constant 0 : i32
    %c0_i32_0 = arith.constant 0 : i32
    return %c0_i32, %arg0 : i32, i32
  }
}

</mosaic_0001>

<llo_original>
// kernel: tpu_custom_call.1
$region0: #{tpu_custom_call.1}
  #allocation0 [shape = 'u32[]', space=smem, size = 0x4, offset = 0x4, fixed_abs, tag = 'smem constant byte address 0x4 - core index']
  #allocation1 [shape = 'u32[72,128]{1,0:T(1,128)}', space=vmem, size = 0x9000, scoped, tag = 'internal scratch']
  %s0 = inlined_call_operand.hbm [shape: f32[8,32], index: 0, kind: input, shape index: {}]
  %s1 = inlined_call_operand.vmem [shape: f32[4,32], index: 1, kind: input, shape index: {}]
  %s2 = inlined_call_operand.vmem [shape: f32[4,1], index: 2, kind: input, shape index: {}]
  %s3 = inlined_call_operand.hbm [shape: f32[4,8], index: 3, kind: output, shape index: {}]
  %s4 = sld [smem:[#allocation0]]
  $region26: #{tpu_custom_call.1} parent=0
    _
  %s6 = ssub.s32 1, %s4
  %s7 = scalar_select 0, %s6, %s4
  $region1: #{tpu_custom_call.1} parent=0
    #allocation2 [shape = 'u8[4096]{0}', space=vmem, size = 0x1000, scoped, tag = 'input window, operand 0, single buffered']
    #allocation3 [shape = 's32[1]{0}', space=sflag, size = 0x4, scoped, tag = 'scoped memory for tpu_custom_call.1']
    #allocation4 [shape = 's32[1]{0}', space=sflag, size = 0x4, scoped, tag = 'scoped memory for tpu_custom_call.1']
    #allocation5 [shape = 'u8[2048]{0}', space=vmem, size = 0x800, scoped, tag = 'output window, operand 0, single buffered']
    %8 = vsyncpa [#allocation3], 0
    %9 = vsyncpa [#allocation4], 0
    // Predicated region
    $region2: #{tpu_custom_call.1} parent=1 // pred_check
      _
    $region3: #{tpu_custom_call.1} parent=1 // pred_check_branch
      %11 = sbr.rel (0) target = $region5
    $region4: #{tpu_custom_call.1} parent=1 // pred_region
      %13 = vsyncadd [#allocation3], 0
      %s15 = sshll.u32 %s0, 4
      %s16 = int_to_ptr.hbm [resolvable:$true] %s15
      %s17 = sshll.u32 [#allocation2], 4
      %s18 = int_to_ptr.vmem [resolvable:$true] %s17
      %20 = dma.hbm_to_vmem [thread:$0]  %s16, 128, %s18, [#allocation3]
    $region5: #{tpu_custom_call.1} parent=1 // pred_fallthru
      _
    // Predicated region
    $region6: #{tpu_custom_call.1} parent=1 // pred_check
      _
    $region7: #{tpu_custom_call.1} parent=1 // pred_check_branch
      %22 = sbr.rel (0) target = $region9
    $region8: #{tpu_custom_call.1} parent=1 // pred_region
      _
    $region9: #{tpu_custom_call.1} parent=1 // pred_fallthru
      _
    // Predicated region
    $region10: #{tpu_custom_call.1} parent=1 // pred_check
      _
    $region11: #{tpu_custom_call.1} parent=1 // pred_check_branch
      %24 = sbr.rel (0) target = $region13
    $region12: #{tpu_custom_call.1} parent=1 // pred_region
      _
    $region13: #{tpu_custom_call.1} parent=1 // pred_fallthru
      _
    // Predicated region
    $region14: #{tpu_custom_call.1} parent=1 // pred_check
      _
    $region15: #{tpu_custom_call.1} parent=1 // pred_check_branch
      %26 = sbr.rel (0) target = $region17
    $region16: #{tpu_custom_call.1} parent=1 // pred_region
      %28 = dma.done [#allocation3], 128
    $region17: #{tpu_custom_call.1} parent=1 // pred_fallthru
      _
    %v29 = vld [vmem:[#allocation2] sm:$0xff]
    %v30 = vld [vmem:[%s1] sm:$0xf]
    %v31 = vld [vmem:[%s2] sm:$0xf]
    %vm32 = vcmask 261120
    %v34 = vsel %vm32, %v30, 0
    %v37 = vsel %vm32, %v29, 0
    %39 = vmatpush.xpose.msra.mxu0 0.0
    %40 = vmatpush.xpose.msra.mxu0 0.0
    %41 = vmatpush.xpose.msra.mxu0 0.0
    %42 = vmatpush.xpose.msra.mxu0 0.0
    %43 = vmatpush.xpose.msra.mxu0 0.0
    %44 = vmatpush.xpose.msra.mxu0 0.0
    %45 = vmatpush.xpose.msra.mxu0 0.0
    %46 = vmatpush.xpose.msra.mxu0 0.0
    %47 = vmatpush.xpose.msra.mxu0 0.0
    %48 = vmatpush.xpose.msra.mxu0 0.0
    %49 = vmatpush.xpose.msra.mxu0 0.0
    %50 = vmatpush.xpose.msra.mxu0 0.0
    %51 = vmatpush.xpose.msra.mxu0 0.0
    %52 = vmatpush.xpose.msra.mxu0 0.0
    %53 = vmatpush.xpose.msra.mxu0 0.0
    %54 = vmatpush.xpose.msra.mxu0 %v37
    %55 = vmatmul.f32.gmra.mxu0 %v34
    %v56 = vpop.f32.mrf.mxu0
    %v57 = vadd.f32 0.0, %v56
    %58 = vdwg.mxu0
    %v59 = vmul.f32 %v29, %v29
    %v61 = vsel %vm32, 1.0, 0
    %v64 = vsel %vm32, %v59, 0
    %66 = vmatpush.xpose.msra.mxu0 0.0
    %67 = vmatpush.xpose.msra.mxu0 0.0
    %68 = vmatpush.xpose.msra.mxu0 0.0
    %69 = vmatpush.xpose.msra.mxu0 0.0
    %70 = vmatpush.xpose.msra.mxu0 0.0
    %71 = vmatpush.xpose.msra.mxu0 0.0
    %72 = vmatpush.xpose.msra.mxu0 0.0
    %73 = vmatpush.xpose.msra.mxu0 0.0
    %74 = vmatpush.xpose.msra.mxu0 0.0
    %75 = vmatpush.xpose.msra.mxu0 0.0
    %76 = vmatpush.xpose.msra.mxu0 0.0
    %77 = vmatpush.xpose.msra.mxu0 0.0
    %78 = vmatpush.xpose.msra.mxu0 0.0
    %79 = vmatpush.xpose.msra.mxu0 0.0
    %80 = vmatpush.xpose.msra.mxu0 0.0
    %81 = vmatpush.xpose.msra.mxu0 %v64
    %82 = vmatmul.f32.gmra.mxu0 %v61
    %v83 = vpop.f32.mrf.mxu0
    %v84 = vadd.f32 0.0, %v83
    %85 = vdwg.mxu0
    %87 = vset.pattern.permute.xlu0 0
    %88 = vperm.xlu0 %87, %v31
    %v89 = vpop.permute.xlu0 %88
    %v91 = vperm.slane %v84, 0
    %v92 = vadd.f32 %v89, %v91
    %v93 = vadd.f32 %v92, %v57
    %v94 = vmax.f32 %v93, 0.0
    %v95 = vadd.f32 %v94, 1.0
    %v96 = vrcp.pop %v95
    %v97 = vmul.f32 %v95, %v96
    %v98 = vsub.f32 2.0, %v97
    %v99 = vmul.f32 %v96, %v98
    %vm100 = vcmask 60416
    %v101 = vsel %vm100, %v99, 0.0
    %v102 = vrot.slane %v101, 4
    %v103 = vadd.f32 %v101, %v102
    %v104 = vrot.slane %v103, 2
    %v105 = vadd.f32 %v103, %v104
    %v106 = vrot.slane %v105, 1
    %v107 = vadd.f32 %v105, %v106
    %v108 = vrcp.pop %v107
    %v109 = vmul.f32 %v107, %v108
    %v110 = vsub.f32 2.0, %v109
    %v111 = vmul.f32 %v108, %v110
    %v112 = vmul.f32 %v99, %v111
    %113 = vst.msk [vmem:[#allocation5] sm:$0xf] %vm100, %v112
    // Predicated region
    $region18: #{tpu_custom_call.1} parent=1 // pred_check
      _
    $region19: #{tpu_custom_call.1} parent=1 // pred_check_branch
      %115 = sbr.rel (0) target = $region21
    $region20: #{tpu_custom_call.1} parent=1 // pred_region
      %117 = vsyncadd [#allocation4], 0
      %s119 = sshll.u32 [#allocation5], 4
      %s120 = int_to_ptr.vmem [resolvable:$true] %s119
      %s121 = sshll.u32 %s3, 4
      %s122 = int_to_ptr.hbm [resolvable:$true] %s121
      %124 = dma.vmem_to_hbm [thread:$0]  %s120, 64, %s122, [#allocation4]
    $region21: #{tpu_custom_call.1} parent=1 // pred_fallthru
      _
    // Predicated region
    $region22: #{tpu_custom_call.1} parent=1 // pred_check
      _
    $region23: #{tpu_custom_call.1} parent=1 // pred_check_branch
      %126 = sbr.rel (0) target = $region25
    $region24: #{tpu_custom_call.1} parent=1 // pred_region
      %128 = dma.done [#allocation4], 64
    $region25: #{tpu_custom_call.1} parent=1 // pred_fallthru
      _
    %129 = vsyncpa [#allocation3], 1
    %130 = vsyncpa [#allocation4], 1

</llo_original>
